<compile_context>
chip_gen: v6e
topology: v6e:2x2x1
jax: 0.10.0
libtpu: 0.0.40
codegen_flags: <defaults>
</compile_context>

<pallas_src>
import functools
import numpy as np
import jax
import jax.numpy as jnp
from jax import lax
from jax.experimental import pallas as pl
from jax.experimental.pallas import tpu as pltpu

NEG = -100000.0      # masking value used by the torch module
LANE = 128           # TPU lane width; kernel outputs / fused weights are padded to this


def _peptide_kernel(x_ref, pep_ref, len_ref, wcat_ref, bcat_ref, gum_ref,
                    act_ref, stats_ref, *, num_amino):
    T, BB, D = x_ref.shape
    A = num_amino

    # ---- fused pos+amino linear: one (T*BB, D) @ (D, 128) MXU matmul (bf16 in, f32 acc)
    x2 = x_ref[...].reshape(T * BB, D)
    logits = jnp.dot(x2, wcat_ref[...], preferred_element_type=jnp.float32)
    logits = logits + bcat_ref[...].astype(jnp.float32)              # (T*BB, LANE)
    logits3 = logits.reshape(T, BB, LANE)
    # lane 0      -> pos_action_net(x)   (Linear D->1)  for every timestep
    # lanes 1..A  -> amino_action_net(x) (Linear D->A)  for every timestep

    # ---- position head, lane-dense (BB, T): mask, log-softmax, Gumbel-max ------------
    pos_bt = jnp.transpose(logits3[:, :, 0], (1, 0))                 # (BB, T) one XLU transpose
    lengths = len_ref[...]                                           # (BB, 1) int32
    t_iota = lax.broadcasted_iota(jnp.int32, (BB, T), 1)
    pos_bt = jnp.where(t_iota < lengths, pos_bt, NEG)                # masked pos logits

    p_max = jnp.max(pos_bt, axis=-1, keepdims=True)
    p_lse = jnp.log(jnp.sum(jnp.exp(pos_bt - p_max), axis=-1, keepdims=True)) + p_max
    pos_lp = pos_bt - p_lse                                          # log-probs over T

    pert = pos_bt + gum_ref[:, 0:T]                                  # Gumbel-perturbed
    pert_max = jnp.max(pert, axis=-1, keepdims=True)
    pos_ac = jnp.min(jnp.where(pert == pert_max, t_iota, T),
                     axis=-1, keepdims=True)                         # (BB,1) argmax, first tie
    onehot_bt = t_iota == pos_ac                                     # (BB, T)
    pos_logpd = jnp.sum(jnp.where(onehot_bt, pos_lp, 0.0), axis=-1, keepdims=True)

    # ---- amino head: pick the pre-computed amino row at t = pos_ac[b] ----------------
    onehot_tb1 = (lax.broadcasted_iota(jnp.int32, (T, BB, 1), 0)
                  == pos_ac.reshape(1, BB, 1))
    amino_logits = jnp.sum(jnp.where(onehot_tb1, logits3[:, :, 1:A + 1], 0.0),
                           axis=0)                                   # (BB, A)

    # mask the amino acid currently at the selected position (torch indexes pep-1;
    # negative values wrap like torch advanced indexing, i.e. pep==0 masks column A-1).
    pep_at_pos = jnp.sum(jnp.where(onehot_bt, pep_ref[...], 0), axis=-1, keepdims=True)
    mask_amino = pep_at_pos - 1
    mask_amino = jnp.where(mask_amino < 0, mask_amino + A, mask_amino)
    a_iota = lax.broadcasted_iota(jnp.int32, (BB, A), 1)
    amino_logits = jnp.where(a_iota == mask_amino, NEG, amino_logits)

    a_max = jnp.max(amino_logits, axis=-1, keepdims=True)
    a_lse = jnp.log(jnp.sum(jnp.exp(amino_logits - a_max), axis=-1, keepdims=True)) + a_max
    am_lp = amino_logits - a_lse

    pert_a = amino_logits + gum_ref[:, T:T + A]
    pa_max = jnp.max(pert_a, axis=-1, keepdims=True)
    amino_ac = jnp.min(jnp.where(pert_a == pa_max, a_iota, A),
                       axis=-1, keepdims=True)                       # (BB, 1)
    amino_logpd = jnp.sum(jnp.where(a_iota == amino_ac, am_lp, 0.0),
                          axis=-1, keepdims=True)

    # ---- epilogue: assemble both (BB, 128) tiles in registers, TWO unmasked stores ---
    act_ref[...] = jnp.concatenate(
        [pos_ac, amino_ac + 1, jnp.zeros((BB, LANE - 2), jnp.int32)], axis=-1)

    pieces = [pos_bt, amino_logits, pos_logpd + amino_logpd]
    pad = LANE - (T + A + 1)
    if pad:
        pieces.append(jnp.zeros((BB, pad), jnp.float32))
    stats_ref[...] = jnp.concatenate(pieces, axis=-1)


def pack_params(params, num_amino=20, lane=LANE, dtype=jnp.bfloat16):
    """One-time packing of the two Linear layers into a fused (D, 128) weight + bias."""
    w_pos = jnp.asarray(params["w_pos"], jnp.float32)                 # (1, D)
    b_pos = jnp.asarray(params["b_pos"], jnp.float32).reshape(-1)     # (1,)
    w_am = jnp.asarray(params["w_amino"], jnp.float32)                # (D, A) == weight.T
    b_am = jnp.asarray(params["b_amino"], jnp.float32).reshape(-1)    # (A,)
    D = w_am.shape[0]
    A = num_amino
    assert A + 1 <= lane
    w_cat = jnp.zeros((D, lane), jnp.float32)
    w_cat = w_cat.at[:, 0].set(w_pos[0]).at[:, 1:A + 1].set(w_am)
    b_cat = jnp.zeros((1, lane), jnp.float32)
    b_cat = b_cat.at[0, 0].set(b_pos[0]).at[0, 1:A + 1].set(b_am)
    return w_cat.astype(dtype), b_cat.astype(dtype)


def _choose_b_block(batch, requested=None):
    if requested is not None and batch % requested == 0 and \
            (requested == batch or requested % 8 == 0):
        return requested
    # >= 2 grid steps only when the batch is large enough that "parallel" can shard the
    # work onto v7x's second TensorCore; otherwise a single step (v5e/v6e have one TC and
    # every extra grid step costs ~0.35 us of pure overhead).
    if batch >= 16 and batch % 2 == 0 and (batch // 2) % 8 == 0:
        return batch // 2
    return batch


@functools.partial(jax.jit, static_argnames=("num_amino", "b_block"))
def peptide_action_net_forward(latent_amino_tbd, peptides, lengths, w_cat, b_cat,
                               gumbel, num_amino=20, b_block=None):
    """latent_amino_tbd: (T, B, D) seq-first (native PyTorch RNN layout), bf16 or f32."""
    T, B, D = latent_amino_tbd.shape
    A = num_amino
    assert T + A + 1 <= LANE, "packed f32 output does not fit in one 128-lane row"
    bb = _choose_b_block(B, b_block)

    pep_i32 = peptides.astype(jnp.int32)
    len_i32 = lengths.astype(jnp.int32).reshape(B, 1)
    w_cat = w_cat.astype(latent_amino_tbd.dtype)      # keep MXU operands in input dtype
    b_cat = b_cat.astype(latent_amino_tbd.dtype)
    gum_f32 = gumbel.astype(jnp.float32)              # (B, LANE) noise, one vreg per step

    kernel = functools.partial(_peptide_kernel, num_amino=A)

    grid_spec = pltpu.PrefetchScalarGridSpec(
        num_scalar_prefetch=0,
        grid=(B // bb,),
        in_specs=[
            pl.BlockSpec((T, bb, D), lambda i: (0, i, 0)),   # latent_amino (seq-first)
            pl.BlockSpec((bb, T), lambda i: (i, 0)),         # peptides
            pl.BlockSpec((bb, 1), lambda i: (i, 0)),         # lengths
            pl.BlockSpec((D, LANE), lambda i: (0, 0)),       # fused weights (tiny, const)
            pl.BlockSpec((1, LANE), lambda i: (0, 0)),       # fused bias
            pl.BlockSpec((bb, LANE), lambda i: (i, 0)),      # Gumbel noise
        ],
        out_specs=(
            pl.BlockSpec((bb, LANE), lambda i: (i, 0)),      # packed int32 action tile
            pl.BlockSpec((bb, LANE), lambda i: (i, 0)),      # packed float32 stats tile
        ),
    )

    # At production T/D, re-derive the latent tile against v7x's 64 MiB VMEM and pass
    # vmem_limit_bytes explicitly; at these shapes the defaults have ample headroom.
    act_packed, stats = pl.pallas_call(
        kernel,
        out_shape=(
            jax.ShapeDtypeStruct((B, LANE), jnp.int32),
            jax.ShapeDtypeStruct((B, LANE), jnp.float32),
        ),
        grid_spec=grid_spec,
        compiler_params=pltpu.CompilerParams(
            dimension_semantics=("parallel",)),
    )(latent_amino_tbd, pep_i32, len_i32, w_cat, b_cat, gum_f32)

    action = act_packed[:, :2]                    # (B, 2) == torch pad_sequence result
    pos_pd = stats[:, :T]                         # (B, T) masked position logits
    amino_pd = stats[:, T:T + A]                  # (B, A) masked amino logits
    logpd = stats[:, T + A]                       # (B,)
    return action, logpd, (pos_pd, amino_pd)


if __name__ == "__main__":
    B, T, D, A = 8, 16, 32, 20    # batch, seq len, latent_dim, num amino acids

    root = jax.random.PRNGKey(0)
    k_x, k_pep, k_len, k_wp, k_bp, k_wa, k_ba, k_g = jax.random.split(root, 8)

    latent_amino = jax.random.normal(k_x, (T, B, D), jnp.float32).astype(jnp.bfloat16)
    peptides = jax.random.randint(k_pep, (B, T), 1, A + 1, dtype=jnp.int32)
    lengths = jax.random.randint(k_len, (B,), 5, T + 1, dtype=jnp.int32)
    lengths = lengths.at[0].set(T)     # ensure max(lengths) == T

    bound = 1.0 / np.sqrt(D)
    params = {
        "w_pos": jax.random.uniform(k_wp, (1, D), jnp.float32, -bound, bound),
        "b_pos": jax.random.uniform(k_bp, (1, 1), jnp.float32, -bound, bound),
        "w_amino": jax.random.uniform(k_wa, (D, A), jnp.float32, -bound, bound),
        "b_amino": jax.random.uniform(k_ba, (1, A), jnp.float32, -bound, bound),
    }
    w_cat, b_cat = pack_params(params, num_amino=A, dtype=jnp.bfloat16)
    gumbel = jax.random.gumbel(k_g, (B, LANE), jnp.float32)   # one lane-dense noise tile

    action, logpd, (pos_pd, amino_pd) = peptide_action_net_forward(
        latent_amino, peptides, lengths, w_cat, b_cat, gumbel, num_amino=A)
    jax.block_until_ready((action, logpd, pos_pd, amino_pd))

    # ---- consistency checks against a pure-JAX reference using the same bf16-rounded
    #      parameters (deterministic parts, and log-probs at the kernel's own samples).
    xb = jnp.transpose(latent_amino.astype(jnp.float32), (1, 0, 2))       # (B, T, D)
    w_pos = params["w_pos"].astype(jnp.bfloat16).astype(jnp.float32)
    b_pos = params["b_pos"].astype(jnp.bfloat16).astype(jnp.float32)
    w_am = params["w_amino"].astype(jnp.bfloat16).astype(jnp.float32)
    b_am = params["b_amino"].astype(jnp.bfloat16).astype(jnp.float32)

    pos_ref = jnp.einsum("btd,d->bt", xb, w_pos[0]) + b_pos[0, 0]
    pos_ref = jnp.where(jnp.arange(T)[None, :] < lengths[:, None], pos_ref, NEG)

    pos_ac = np.asarray(action[:, 0])
    amino_ac = np.asarray(action[:, 1])

    np.testing.assert_allclose(np.asarray(pos_pd), np.asarray(pos_ref), atol=1e-2)
    assert np.all(pos_ac >= 0) and np.all(pos_ac < np.asarray(lengths)), "invalid pos sample"

    feat = xb[jnp.arange(B), pos_ac]                                      # (B, D)
    am_ref = feat @ w_am + b_am[0]
    mask = peptides[jnp.arange(B), pos_ac] - 1
    am_ref = am_ref.at[jnp.arange(B), mask].set(NEG)
    np.testing.assert_allclose(np.asarray(amino_pd), np.asarray(am_ref), atol=1e-2)
    assert np.all(amino_ac >= 1) and np.all(amino_ac <= A), "invalid amino sample"

    pos_lp = jax.nn.log_softmax(pos_ref, axis=-1)
    am_lp = jax.nn.log_softmax(am_ref, axis=-1)
    logpd_ref = (jnp.take_along_axis(pos_lp, jnp.asarray(pos_ac)[:, None], 1)[:, 0]
                 + jnp.take_along_axis(am_lp, jnp.asarray(amino_ac - 1)[:, None], 1)[:, 0])
    np.testing.assert_allclose(np.asarray(logpd), np.asarray(logpd_ref), atol=1e-2)

    print("KERNEL_OK")
</pallas_src>

<mosaic_0001>
module attributes {stable_mosaic.version = 11 : i64} {
  func.func @_peptide_kernel(%arg0: i32, %arg1: memref<16x8x32xbf16, #tpu.memory_space<vmem>>, %arg2: memref<8x16xi32, #tpu.memory_space<vmem>>, %arg3: memref<8x1xi32, #tpu.memory_space<vmem>>, %arg4: memref<32x128xbf16, #tpu.memory_space<vmem>>, %arg5: memref<1x128xbf16, #tpu.memory_space<vmem>>, %arg6: memref<8x128xf32, #tpu.memory_space<vmem>>, %arg7: memref<8x128xi32, #tpu.memory_space<vmem>>, %arg8: memref<8x128xf32, #tpu.memory_space<vmem>>) attributes {dimension_semantics = [#tpu.dimension_semantics<parallel>], iteration_bounds = array<i64: 1>, scalar_prefetch = 0 : i64, scratch_operands = 0 : i64, tpu.core_type = #tpu.core_type<tc>, window_params = [{transform_indices = @transform_0, window_bounds = array<i64: 16, 8, 32>}, {transform_indices = @transform_1, window_bounds = array<i64: 8, 16>}, {transform_indices = @transform_2, window_bounds = array<i64: 8, 1>}, {pipeline_mode = #tpu.pipeline_mode<synchronous>, transform_indices = @transform_3, window_bounds = array<i64: 32, 128>}, {pipeline_mode = #tpu.pipeline_mode<synchronous>, transform_indices = @transform_4, window_bounds = array<i64: 1, 128>}, {transform_indices = @transform_5, window_bounds = array<i64: 8, 128>}, {transform_indices = @transform_6, window_bounds = array<i64: 8, 128>}, {transform_indices = @transform_7, window_bounds = array<i64: 8, 128>}]} {
    %c0 = arith.constant 0 : index
    %c0_0 = arith.constant 0 : index
    %c0_1 = arith.constant 0 : index
    %0 = vector.load %arg1[%c0, %c0_0, %c0_1] : memref<16x8x32xbf16, #tpu.memory_space<vmem>>, vector<16x8x32xbf16>
    %1 = vector.shape_cast %0 : vector<16x8x32xbf16> to vector<128x32xbf16>
    %c0_2 = arith.constant 0 : index
    %c0_3 = arith.constant 0 : index
    %2 = vector.load %arg4[%c0_2, %c0_3] : memref<32x128xbf16, #tpu.memory_space<vmem>>, vector<32x128xbf16>
    %cst = arith.constant dense<0.000000e+00> : vector<128x128xf32>
    %3 = tpu.matmul %1, %2, %cst {dimension_numbers = #tpu.dot_dimension_numbers<[1], [0], [0], [1], [0, 0, 1, 1], [], []>} : vector<128x32xbf16>, vector<32x128xbf16>, vector<128x128xf32> -> vector<128x128xf32>
    %c0_4 = arith.constant 0 : index
    %c0_5 = arith.constant 0 : index
    %4 = vector.load %arg5[%c0_4, %c0_5] : memref<1x128xbf16, #tpu.memory_space<vmem>>, vector<1x128xbf16>
    %5 = arith.extf %4 : vector<1x128xbf16> to vector<1x128xf32>
    %6 = vector.broadcast %5 : vector<1x128xf32> to vector<128x128xf32>
    %7 = arith.addf %3, %6 : vector<128x128xf32>
    %8 = vector.shape_cast %7 : vector<128x128xf32> to vector<16x8x128xf32>
    %9 = vector.extract_strided_slice %8 {offsets = [0, 0, 0], sizes = [16, 8, 1], strides = [1, 1, 1]} : vector<16x8x128xf32> to vector<16x8x1xf32>
    %10 = vector.shape_cast %9 : vector<16x8x1xf32> to vector<16x8xf32>
    %11 = tpu.transpose %10, [1, 0] : vector<16x8xf32> -> vector<8x16xf32>
    %c0_6 = arith.constant 0 : index
    %c0_7 = arith.constant 0 : index
    %12 = vector.load %arg3[%c0_6, %c0_7] : memref<8x1xi32, #tpu.memory_space<vmem>>, vector<8x1xi32>
    %13 = tpu.iota {dimensions = array<i32: 1>} : vector<8x16xi32>
    %14 = vector.broadcast %12 : vector<8x1xi32> to vector<8x16xi32>
    %15 = arith.cmpi slt, %13, %14 : vector<8x16xi32>
    %cst_8 = arith.constant -1.000000e+05 : f32
    %16 = vector.broadcast %cst_8 : f32 to vector<8x16xf32>
    %17 = arith.select %15, %11, %16 : vector<8x16xi1>, vector<8x16xf32>
    %cst_9 = arith.constant dense<0xFF800000> : vector<8xf32>
    %18 = vector.multi_reduction <maximumf>, %17, %cst_9 [1] : vector<8x16xf32> to vector<8xf32>
    %19 = vector.shape_cast %18 : vector<8xf32> to vector<8x1xf32>
    %20 = vector.broadcast %19 : vector<8x1xf32> to vector<8x16xf32>
    %21 = arith.subf %17, %20 : vector<8x16xf32>
    %22 = math.exp %21 : vector<8x16xf32>
    %cst_10 = arith.constant dense<0.000000e+00> : vector<8xf32>
    %23 = vector.multi_reduction <add>, %22, %cst_10 [1] : vector<8x16xf32> to vector<8xf32>
    %24 = vector.shape_cast %23 : vector<8xf32> to vector<8x1xf32>
    %25 = math.log %24 : vector<8x1xf32>
    %26 = arith.addf %25, %19 : vector<8x1xf32>
    %27 = vector.broadcast %26 : vector<8x1xf32> to vector<8x16xf32>
    %28 = arith.subf %17, %27 : vector<8x16xf32>
    %c0_11 = arith.constant 0 : index
    %c0_12 = arith.constant 0 : index
    %29 = vector.load %arg6[%c0_11, %c0_12] : memref<8x128xf32, #tpu.memory_space<vmem>>, vector<8x16xf32>
    %30 = arith.addf %17, %29 : vector<8x16xf32>
    %cst_13 = arith.constant dense<0xFF800000> : vector<8xf32>
    %31 = vector.multi_reduction <maximumf>, %30, %cst_13 [1] : vector<8x16xf32> to vector<8xf32>
    %32 = vector.shape_cast %31 : vector<8xf32> to vector<8x1xf32>
    %33 = vector.broadcast %32 : vector<8x1xf32> to vector<8x16xf32>
    %34 = arith.cmpf oeq, %30, %33 : vector<8x16xf32>
    %c16_i32 = arith.constant 16 : i32
    %35 = vector.broadcast %c16_i32 : i32 to vector<8x16xi32>
    %36 = arith.select %34, %13, %35 : vector<8x16xi1>, vector<8x16xi32>
    %cst_14 = arith.constant dense<2147483647> : vector<8xi32>
    %37 = vector.multi_reduction <minsi>, %36, %cst_14 [1] : vector<8x16xi32> to vector<8xi32>
    %38 = vector.shape_cast %37 : vector<8xi32> to vector<8x1xi32>
    %39 = vector.broadcast %38 : vector<8x1xi32> to vector<8x16xi32>
    %40 = arith.cmpi eq, %13, %39 : vector<8x16xi32>
    %cst_15 = arith.constant 0.000000e+00 : f32
    %41 = vector.broadcast %cst_15 : f32 to vector<8x16xf32>
    %42 = arith.select %40, %28, %41 : vector<8x16xi1>, vector<8x16xf32>
    %cst_16 = arith.constant dense<0.000000e+00> : vector<8xf32>
    %43 = vector.multi_reduction <add>, %42, %cst_16 [1] : vector<8x16xf32> to vector<8xf32>
    %44 = vector.shape_cast %43 : vector<8xf32> to vector<8x1xf32>
    %45 = tpu.iota {dimensions = array<i32: 0>} : vector<16x8x1xi32>
    %46 = vector.shape_cast %38 : vector<8x1xi32> to vector<1x8x1xi32>
    %47 = vector.broadcast %46 : vector<1x8x1xi32> to vector<16x8x1xi32>
    %48 = arith.cmpi eq, %45, %47 : vector<16x8x1xi32>
    %49 = vector.extract_strided_slice %8 {offsets = [0, 0, 1], sizes = [16, 8, 20], strides = [1, 1, 1]} : vector<16x8x128xf32> to vector<16x8x20xf32>
    %cst_17 = arith.constant 0.000000e+00 : f32
    %50 = vector.shape_cast %48 : vector<16x8x1xi1> to vector<16x8x1xi1>
    %51 = vector.broadcast %50 : vector<16x8x1xi1> to vector<16x8x20xi1>
    %52 = vector.broadcast %cst_17 : f32 to vector<16x8x20xf32>
    %53 = arith.select %51, %49, %52 : vector<16x8x20xi1>, vector<16x8x20xf32>
    %cst_18 = arith.constant dense<0.000000e+00> : vector<8x20xf32>
    %54 = vector.multi_reduction <add>, %53, %cst_18 [0] : vector<16x8x20xf32> to vector<8x20xf32>
    %c0_19 = arith.constant 0 : index
    %c0_20 = arith.constant 0 : index
    %55 = vector.load %arg2[%c0_19, %c0_20] : memref<8x16xi32, #tpu.memory_space<vmem>>, vector<8x16xi32>
    %c0_i32 = arith.constant 0 : i32
    %56 = vector.broadcast %c0_i32 : i32 to vector<8x16xi32>
    %57 = arith.select %40, %55, %56 : vector<8x16xi1>, vector<8x16xi32>
    %cst_21 = arith.constant dense<0> : vector<8xi32>
    %58 = vector.multi_reduction <add>, %57, %cst_21 [1] : vector<8x16xi32> to vector<8xi32>
    %59 = vector.shape_cast %58 : vector<8xi32> to vector<8x1xi32>
    %c1_i32 = arith.constant 1 : i32
    %60 = vector.broadcast %c1_i32 : i32 to vector<8x1xi32>
    %61 = arith.subi %59, %60 : vector<8x1xi32>
    %c0_i32_22 = arith.constant 0 : i32
    %62 = vector.broadcast %c0_i32_22 : i32 to vector<8x1xi32>
    %63 = arith.cmpi slt, %61, %62 : vector<8x1xi32>
    %c20_i32 = arith.constant 20 : i32
    %64 = vector.broadcast %c20_i32 : i32 to vector<8x1xi32>
    %65 = arith.addi %61, %64 : vector<8x1xi32>
    %66 = arith.select %63, %65, %61 : vector<8x1xi1>, vector<8x1xi32>
    %67 = tpu.iota {dimensions = array<i32: 1>} : vector<8x20xi32>
    %68 = vector.broadcast %66 : vector<8x1xi32> to vector<8x20xi32>
    %69 = arith.cmpi eq, %67, %68 : vector<8x20xi32>
    %cst_23 = arith.constant -1.000000e+05 : f32
    %70 = vector.broadcast %cst_23 : f32 to vector<8x20xf32>
    %71 = arith.select %69, %70, %54 : vector<8x20xi1>, vector<8x20xf32>
    %cst_24 = arith.constant dense<0xFF800000> : vector<8xf32>
    %72 = vector.multi_reduction <maximumf>, %71, %cst_24 [1] : vector<8x20xf32> to vector<8xf32>
    %73 = vector.shape_cast %72 : vector<8xf32> to vector<8x1xf32>
    %74 = vector.broadcast %73 : vector<8x1xf32> to vector<8x20xf32>
    %75 = arith.subf %71, %74 : vector<8x20xf32>
    %76 = math.exp %75 : vector<8x20xf32>
    %cst_25 = arith.constant dense<0.000000e+00> : vector<8xf32>
    %77 = vector.multi_reduction <add>, %76, %cst_25 [1] : vector<8x20xf32> to vector<8xf32>
    %78 = vector.shape_cast %77 : vector<8xf32> to vector<8x1xf32>
    %79 = math.log %78 : vector<8x1xf32>
    %80 = arith.addf %79, %73 : vector<8x1xf32>
    %81 = vector.broadcast %80 : vector<8x1xf32> to vector<8x20xf32>
    %82 = arith.subf %71, %81 : vector<8x20xf32>
    %c0_26 = arith.constant 0 : index
    %c16 = arith.constant 16 : index
    %83 = vector.load %arg6[%c0_26, %c16] : memref<8x128xf32, #tpu.memory_space<vmem>>, vector<8x20xf32>
    %84 = arith.addf %71, %83 : vector<8x20xf32>
    %cst_27 = arith.constant dense<0xFF800000> : vector<8xf32>
    %85 = vector.multi_reduction <maximumf>, %84, %cst_27 [1] : vector<8x20xf32> to vector<8xf32>
    %86 = vector.shape_cast %85 : vector<8xf32> to vector<8x1xf32>
    %87 = vector.broadcast %86 : vector<8x1xf32> to vector<8x20xf32>
    %88 = arith.cmpf oeq, %84, %87 : vector<8x20xf32>
    %c20_i32_28 = arith.constant 20 : i32
    %89 = vector.broadcast %c20_i32_28 : i32 to vector<8x20xi32>
    %90 = arith.select %88, %67, %89 : vector<8x20xi1>, vector<8x20xi32>
    %cst_29 = arith.constant dense<2147483647> : vector<8xi32>
    %91 = vector.multi_reduction <minsi>, %90, %cst_29 [1] : vector<8x20xi32> to vector<8xi32>
    %92 = vector.shape_cast %91 : vector<8xi32> to vector<8x1xi32>
    %93 = vector.broadcast %92 : vector<8x1xi32> to vector<8x20xi32>
    %94 = arith.cmpi eq, %67, %93 : vector<8x20xi32>
    %cst_30 = arith.constant 0.000000e+00 : f32
    %95 = vector.broadcast %cst_30 : f32 to vector<8x20xf32>
    %96 = arith.select %94, %82, %95 : vector<8x20xi1>, vector<8x20xf32>
    %cst_31 = arith.constant dense<0.000000e+00> : vector<8xf32>
    %97 = vector.multi_reduction <add>, %96, %cst_31 [1] : vector<8x20xf32> to vector<8xf32>
    %98 = vector.shape_cast %97 : vector<8xf32> to vector<8x1xf32>
    %c1_i32_32 = arith.constant 1 : i32
    %99 = vector.broadcast %c1_i32_32 : i32 to vector<8x1xi32>
    %100 = arith.addi %92, %99 : vector<8x1xi32>
    %c0_i32_33 = arith.constant 0 : i32
    %101 = vector.broadcast %c0_i32_33 : i32 to vector<8x126xi32>
    %102 = tpu.concatenate %38, %100, %101 in 1 : vector<8x1xi32>, vector<8x1xi32>, vector<8x126xi32> -> vector<8x128xi32>
    %c0_34 = arith.constant 0 : index
    %c0_35 = arith.constant 0 : index
    %103 = vector.load %arg7[%c0_34, %c0_35] : memref<8x128xi32, #tpu.memory_space<vmem>>, vector<8x128xi32>
    tpu.vector_store %arg7[%c0_34, %c0_35], %102 {strides = array<i32>} : memref<8x128xi32, #tpu.memory_space<vmem>>, vector<8x128xi32>,
    %104 = arith.addf %44, %98 : vector<8x1xf32>
    %cst_36 = arith.constant 0.000000e+00 : f32
    %105 = vector.broadcast %cst_36 : f32 to vector<8x91xf32>
    %106 = tpu.concatenate %17, %71, %104, %105 in 1 : vector<8x16xf32>, vector<8x20xf32>, vector<8x1xf32>, vector<8x91xf32> -> vector<8x128xf32>
    %c0_37 = arith.constant 0 : index
    %c0_38 = arith.constant 0 : index
    %107 = vector.load %arg8[%c0_37, %c0_38] : memref<8x128xf32, #tpu.memory_space<vmem>>, vector<8x128xf32>
    tpu.vector_store %arg8[%c0_37, %c0_38], %106 {strides = array<i32>} : memref<8x128xf32, #tpu.memory_space<vmem>>, vector<8x128xf32>,
    return
  }
  func.func @transform_0(%arg0: i32) -> (i32, i32, i32) {
    %c0_i32 = arith.constant 0 : i32
    %c0_i32_0 = arith.constant 0 : i32
    %c0_i32_1 = arith.constant 0 : i32
    return %c0_i32, %arg0, %c0_i32_0 : i32, i32, i32
  }
  func.func @transform_1(%arg0: i32) -> (i32, i32) {
    %c0_i32 = arith.constant 0 : i32
    %c0_i32_0 = arith.constant 0 : i32
    return %arg0, %c0_i32 : i32, i32
  }
  func.func @transform_2(%arg0: i32) -> (i32, i32) {
    %c0_i32 = arith.constant 0 : i32
    %c0_i32_0 = arith.constant 0 : i32
    return %arg0, %c0_i32 : i32, i32
  }
  func.func @transform_3(%arg0: i32) -> (i32, i32) {
    %c0_i32 = arith.constant 0 : i32
    %c0_i32_0 = arith.constant 0 : i32
    %c0_i32_1 = arith.constant 0 : i32
    return %c0_i32, %c0_i32_0 : i32, i32
  }
  func.func @transform_4(%arg0: i32) -> (i32, i32) {
    %c0_i32 = arith.constant 0 : i32
    %c0_i32_0 = arith.constant 0 : i32
    %c0_i32_1 = arith.constant 0 : i32
    return %c0_i32, %c0_i32_0 : i32, i32
  }
  func.func @transform_5(%arg0: i32) -> (i32, i32) {
    %c0_i32 = arith.constant 0 : i32
    %c0_i32_0 = arith.constant 0 : i32
    return %arg0, %c0_i32 : i32, i32
  }
  func.func @transform_6(%arg0: i32) -> (i32, i32) {
    %c0_i32 = arith.constant 0 : i32
    %c0_i32_0 = arith.constant 0 : i32
    return %arg0, %c0_i32 : i32, i32
  }
  func.func @transform_7(%arg0: i32) -> (i32, i32) {
    %c0_i32 = arith.constant 0 : i32
    %c0_i32_0 = arith.constant 0 : i32
    return %arg0, %c0_i32 : i32, i32
  }
}

</mosaic_0001>

<llo_original>
// kernel: peptide_action_net_forward.1
$region0: #{peptide_action_net_forward.1}
  #allocation0 [shape = 'u32[]', space=smem, size = 0x4, offset = 0x4, fixed_abs, tag = 'smem constant byte address 0x4 - core index']
  #allocation1 [shape = 'u32[144,128]{1,0:T(1,128)}', space=vmem, size = 0x12000, scoped, tag = 'internal scratch']
  %s0 = inlined_call_operand.hbm [shape: bf16[16,8,32], index: 0, kind: input, shape index: {}]
  %s1 = inlined_call_operand.hbm [shape: s32[8,16], index: 1, kind: input, shape index: {}]
  %s2 = inlined_call_operand.vmem [shape: s32[8,1], index: 2, kind: input, shape index: {}]
  %s3 = inlined_call_operand.vmem [shape: bf16[32,128], index: 3, kind: input, shape index: {}]
  %s4 = inlined_call_operand.vmem [shape: bf16[1,128], index: 4, kind: input, shape index: {}]
  %s5 = inlined_call_operand.hbm [shape: f32[8,128], index: 5, kind: input, shape index: {}]
  %s6 = inlined_call_operand.vmem [shape: s32[8,128], index: 6, kind: output, shape index: {0}]
  %s7 = inlined_call_operand.vmem [shape: f32[8,128], index: 7, kind: output, shape index: {1}]
  %8 = xla_tuple %s6, %s7
  %s9 = sld [smem:[#allocation0]]
  $region54: #{peptide_action_net_forward.1} parent=0
    _
  %s11 = ssub.s32 1, %s9
  %s12 = scalar_select 0, %s11, %s9
  $region1: #{peptide_action_net_forward.1} parent=0
    #allocation2 [shape = 'u8[32768]{0}', space=vmem, size = 0x8000, scoped, tag = 'input window, operand 0, single buffered']
    #allocation3 [shape = 's32[1]{0}', space=sflag, size = 0x4, scoped, tag = 'scoped memory for peptide_action_net_forward.1']
    #allocation4 [shape = 'u8[4096]{0}', space=vmem, size = 0x1000, scoped, tag = 'input window, operand 1, single buffered']
    #allocation5 [shape = 's32[1]{0}', space=sflag, size = 0x4, scoped, tag = 'scoped memory for peptide_action_net_forward.1']
    #allocation6 [shape = 'u8[4096]{0}', space=vmem, size = 0x1000, scoped, tag = 'input window, operand 5, single buffered']
    %13 = vsyncpa [#allocation3], 0
    %14 = vsyncpa [#allocation5], 0
    // Predicated region
    $region2: #{peptide_action_net_forward.1} parent=1 // pred_check
      _
    $region3: #{peptide_action_net_forward.1} parent=1 // pred_check_branch
      %16 = sbr.rel (0) target = $region5
    $region4: #{peptide_action_net_forward.1} parent=1 // pred_region
      %s18 = ssub.s32 1024, 1024
      %19 = vsyncadd [#allocation3], %s18
      %s20 = sshll.u32 [#allocation2], 4
      %s21 = int_to_ptr.vmem [resolvable:$true] %s20
      %26 = dma.hbm_to_vmem [thread:$0]  %s0, 1024, %s21, [#allocation3], 64, 64, 4
    $region5: #{peptide_action_net_forward.1} parent=1 // pred_fallthru
      _
    // Predicated region
    $region6: #{peptide_action_net_forward.1} parent=1 // pred_check
      _
    $region7: #{peptide_action_net_forward.1} parent=1 // pred_check_branch
      %28 = sbr.rel (0) target = $region9
    $region8: #{peptide_action_net_forward.1} parent=1 // pred_region
      %s30 = ssub.s32 128, 128
      %31 = vsyncadd [#allocation5], %s30
      %s33 = sshll.u32 [#allocation4], 4
      %s34 = int_to_ptr.vmem [resolvable:$true] %s33
      %36 = dma.hbm_to_vmem [thread:$0]  %s1, 128, %s34, [#allocation5]
    $region9: #{peptide_action_net_forward.1} parent=1 // pred_fallthru
      _
    // Predicated region
    $region10: #{peptide_action_net_forward.1} parent=1 // pred_check
      _
    $region11: #{peptide_action_net_forward.1} parent=1 // pred_check_branch
      %38 = sbr.rel (0) target = $region13
    $region12: #{peptide_action_net_forward.1} parent=1 // pred_region
      _
    $region13: #{peptide_action_net_forward.1} parent=1 // pred_fallthru
      _
    // Predicated region
    $region14: #{peptide_action_net_forward.1} parent=1 // pred_check
      _
    $region15: #{peptide_action_net_forward.1} parent=1 // pred_check_branch
      %40 = sbr.rel (0) target = $region17
    $region16: #{peptide_action_net_forward.1} parent=1 // pred_region
      _
    $region17: #{peptide_action_net_forward.1} parent=1 // pred_fallthru
      _
    // Predicated region
    $region18: #{peptide_action_net_forward.1} parent=1 // pred_check
      _
    $region19: #{peptide_action_net_forward.1} parent=1 // pred_check_branch
      %42 = sbr.rel (0) target = $region21
    $region20: #{peptide_action_net_forward.1} parent=1 // pred_region
      _
    $region21: #{peptide_action_net_forward.1} parent=1 // pred_fallthru
      _
    // Predicated region
    $region22: #{peptide_action_net_forward.1} parent=1 // pred_check
      _
    $region23: #{peptide_action_net_forward.1} parent=1 // pred_check_branch
      %44 = sbr.rel (0) target = $region25
    $region24: #{peptide_action_net_forward.1} parent=1 // pred_region
      %s46 = ssub.s32 128, 128
      %47 = vsyncadd [#allocation5], %s46
      %s49 = sshll.u32 [#allocation6], 4
      %s50 = int_to_ptr.vmem [resolvable:$true] %s49
      %52 = dma.hbm_to_vmem [thread:$0]  %s5, 128, %s50, [#allocation5]
    $region25: #{peptide_action_net_forward.1} parent=1 // pred_fallthru
      _
    // Predicated region
    $region26: #{peptide_action_net_forward.1} parent=1 // pred_check
      _
    $region27: #{peptide_action_net_forward.1} parent=1 // pred_check_branch
      %54 = sbr.rel (0) target = $region29
    $region28: #{peptide_action_net_forward.1} parent=1 // pred_region
      %55 = dma.done [#allocation3], 1024
    $region29: #{peptide_action_net_forward.1} parent=1 // pred_fallthru
      _
    // Predicated region
    $region30: #{peptide_action_net_forward.1} parent=1 // pred_check
      _
    $region31: #{peptide_action_net_forward.1} parent=1 // pred_check_branch
      %57 = sbr.rel (0) target = $region33
    $region32: #{peptide_action_net_forward.1} parent=1 // pred_region
      %58 = dma.done [#allocation5], 128
    $region33: #{peptide_action_net_forward.1} parent=1 // pred_fallthru
      _
    // Predicated region
    $region34: #{peptide_action_net_forward.1} parent=1 // pred_check
      _
    $region35: #{peptide_action_net_forward.1} parent=1 // pred_check_branch
      %60 = sbr.rel (0) target = $region37
    $region36: #{peptide_action_net_forward.1} parent=1 // pred_region
      %61 = dma.done [#allocation5], 128
    $region37: #{peptide_action_net_forward.1} parent=1 // pred_fallthru
      _
    %v63 = vld [vmem:[#allocation2] sm:$0xf]
    %v64 = vld [vmem:[#allocation2 + $0x4] sm:$0xf]
    %v65 = vld [vmem:[#allocation2 + $0x8] sm:$0xf]
    %v66 = vld [vmem:[#allocation2 + $0xc] sm:$0xf]
    %v67 = vld [vmem:[#allocation2 + $0x10] sm:$0xf]
    %v68 = vld [vmem:[#allocation2 + $0x14] sm:$0xf]
    %v69 = vld [vmem:[#allocation2 + $0x18] sm:$0xf]
    %v70 = vld [vmem:[#allocation2 + $0x1c] sm:$0xf]
    %v71 = vld [vmem:[#allocation2 + $0x20] sm:$0xf]
    %v72 = vld [vmem:[#allocation2 + $0x24] sm:$0xf]
    %v73 = vld [vmem:[#allocation2 + $0x28] sm:$0xf]
    %v74 = vld [vmem:[#allocation2 + $0x2c] sm:$0xf]
    %v75 = vld [vmem:[#allocation2 + $0x30] sm:$0xf]
    %v76 = vld [vmem:[#allocation2 + $0x34] sm:$0xf]
    %v77 = vld [vmem:[#allocation2 + $0x38] sm:$0xf]
    %v78 = vld [vmem:[#allocation2 + $0x3c] sm:$0xf]
    %v79 = vld [vmem:[%s3] sm:$0xf]
    %v80 = vld [vmem:[%s3 + $0x4] sm:$0xf]
    %v81 = vld [vmem:[%s3 + $0x8] sm:$0xf]
    %v82 = vld [vmem:[%s3 + $0xc] sm:$0xf]
    %v83 = vld [vmem:[%s4] sm:$0x1]
    %v84 = vunpack.c.l.bf16 %v83
    %v85 = vlaneseq
    %v86 = vshrl.u32 %v85, 7
    %v87 = vsub.s32 0, %v86
    %v88 = vrot.slane %v84, %v87
    %v105 = vunpack.c.l.b16 %v63
    %v106 = vunpack.c.l.b16 %v64
    %v107 = vunpack.c.l.b16 %v65
    %v108 = vunpack.c.l.b16 %v66
    %v109 = vunpack.c.l.b16 %v67
    %v110 = vunpack.c.l.b16 %v68
    %v111 = vunpack.c.l.b16 %v69
    %v112 = vunpack.c.l.b16 %v70
    %v113 = vunpack.c.l.b16 %v71
    %v114 = vunpack.c.l.b16 %v72
    %v115 = vunpack.c.l.b16 %v73
    %v116 = vunpack.c.l.b16 %v74
    %v117 = vunpack.c.l.b16 %v75
    %v118 = vunpack.c.l.b16 %v76
    %v119 = vunpack.c.l.b16 %v77
    %v120 = vunpack.c.l.b16 %v78
    %v121 = vpack.c.b16 %v106, %v105
    %v122 = vpack.c.b16 %v108, %v107
    %v123 = vpack.c.b16 %v110, %v109
    %v124 = vpack.c.b16 %v112, %v111
    %v125 = vpack.c.b16 %v114, %v113
    %v126 = vpack.c.b16 %v116, %v115
    %v127 = vpack.c.b16 %v118, %v117
    %v128 = vpack.c.b16 %v120, %v119
    %v133 = vunpack.c.l.b16 %v79
    %v134 = vunpack.c.l.b16 %v80
    %v135 = vunpack.c.l.b16 %v81
    %v136 = vunpack.c.l.b16 %v82
    %v137 = vpack.c.b16 %v134, %v133
    %v138 = vpack.c.b16 %v136, %v135
    %vm141 = vcmask 261120
    %v143 = vsel %vm141, %v121, 0
    %v146 = vsel %vm141, %v122, 0
    %v149 = vsel %vm141, %v123, 0
    %v152 = vsel %vm141, %v124, 0
    %v155 = vsel %vm141, %v125, 0
    %v158 = vsel %vm141, %v126, 0
    %v161 = vsel %vm141, %v127, 0
    %v164 = vsel %vm141, %v128, 0
    %166 = vmatprep.subr.bf16.mxu0 0
    %167 = vmatpush1.bf16.msra.mxu0 0
    %168 = vmatprep.subr.bf16.mxu0 0
    %169 = vmatpush1.bf16.msra.mxu0 0
    %170 = vmatprep.subr.bf16.mxu0 0
    %171 = vmatpush1.bf16.msra.mxu0 0
    %172 = vmatprep.subr.bf16.mxu0 0
    %173 = vmatpush1.bf16.msra.mxu0 0
    %174 = vmatprep.subr.bf16.mxu0 0
    %175 = vmatpush1.bf16.msra.mxu0 0
    %176 = vmatprep.subr.bf16.mxu0 0
    %177 = vmatpush1.bf16.msra.mxu0 0
    %178 = vmatprep.subr.bf16.mxu0 0
    %179 = vmatpush1.bf16.msra.mxu0 %v138
    %180 = vmatprep.subr.bf16.mxu0 0
    %181 = vmatpush1.bf16.msra.mxu0 %v137
    %182 = vmatprep.subr.bf16.mxu0 0
    %183 = vmatpush2.bf16.msra.mxu0 0
    %184 = vmatprep.subr.bf16.mxu0 0
    %185 = vmatpush2.bf16.msra.mxu0 0
    %186 = vmatprep.subr.bf16.mxu0 0
    %187 = vmatpush2.bf16.msra.mxu0 0
    %188 = vmatprep.subr.bf16.mxu0 0
    %189 = vmatpush2.bf16.msra.mxu0 0
    %190 = vmatprep.subr.bf16.mxu0 0
    %191 = vmatpush2.bf16.msra.mxu0 0
    %192 = vmatprep.subr.bf16.mxu0 0
    %193 = vmatpush2.bf16.msra.mxu0 0
    %194 = vmatprep.subr.bf16.mxu0 0
    %195 = vmatpush2.bf16.msra.mxu0 0
    %196 = vmatprep.subr.bf16.mxu0 0
    %197 = vmatpush2.bf16.msra.mxu0 0
    %198 = vmatprep.mubr.bf16.mxu0 0
    %199 = vmatmul.mubr.bf16.gmra.mxu0 %v143
    %v200 = vpop.f32.mrf.mxu0
    %v201 = vadd.f32 %v88, %v200
    %v202 = vpop.f32.mrf.mxu0
    %v203 = vpop.f32.mrf.mxu0
    %v204 = vadd.f32 %v88, %v203
    %v205 = vpop.f32.mrf.mxu0
    %206 = vmatprep.mubr.bf16.mxu0 0
    %207 = vmatmul.mubr.bf16.gmra.mxu0 %v146
    %v208 = vpop.f32.mrf.mxu0
    %v209 = vadd.f32 %v88, %v208
    %v210 = vpop.f32.mrf.mxu0
    %v211 = vpop.f32.mrf.mxu0
    %v212 = vadd.f32 %v88, %v211
    %v213 = vpop.f32.mrf.mxu0
    %214 = vmatprep.mubr.bf16.mxu0 0
    %215 = vmatmul.mubr.bf16.gmra.mxu0 %v149
    %v216 = vpop.f32.mrf.mxu0
    %v217 = vadd.f32 %v88, %v216
    %v218 = vpop.f32.mrf.mxu0
    %v219 = vpop.f32.mrf.mxu0
    %v220 = vadd.f32 %v88, %v219
    %v221 = vpop.f32.mrf.mxu0
    %222 = vmatprep.mubr.bf16.mxu0 0
    %223 = vmatmul.mubr.bf16.gmra.mxu0 %v152
    %v224 = vpop.f32.mrf.mxu0
    %v225 = vadd.f32 %v88, %v224
    %v226 = vpop.f32.mrf.mxu0
    %v227 = vpop.f32.mrf.mxu0
    %v228 = vadd.f32 %v88, %v227
    %v229 = vpop.f32.mrf.mxu0
    %230 = vmatprep.mubr.bf16.mxu0 0
    %231 = vmatmul.mubr.bf16.gmra.mxu0 %v155
    %v232 = vpop.f32.mrf.mxu0
    %v233 = vadd.f32 %v88, %v232
    %v234 = vpop.f32.mrf.mxu0
    %v235 = vpop.f32.mrf.mxu0
    %v236 = vadd.f32 %v88, %v235
    %v237 = vpop.f32.mrf.mxu0
    %238 = vmatprep.mubr.bf16.mxu0 0
    %239 = vmatmul.mubr.bf16.gmra.mxu0 %v158
    %v240 = vpop.f32.mrf.mxu0
    %v241 = vadd.f32 %v88, %v240
    %v242 = vpop.f32.mrf.mxu0
    %v243 = vpop.f32.mrf.mxu0
    %v244 = vadd.f32 %v88, %v243
    %v245 = vpop.f32.mrf.mxu0
    %246 = vmatprep.mubr.bf16.mxu0 0
    %247 = vmatmul.mubr.bf16.gmra.mxu0 %v161
    %v248 = vpop.f32.mrf.mxu0
    %v249 = vadd.f32 %v88, %v248
    %v250 = vpop.f32.mrf.mxu0
    %v251 = vpop.f32.mrf.mxu0
    %v252 = vadd.f32 %v88, %v251
    %v253 = vpop.f32.mrf.mxu0
    %254 = vmatprep.mubr.bf16.mxu0 0
    %255 = vmatmul.mubr.bf16.gmra.mxu0 %v164
    %v256 = vpop.f32.mrf.mxu0
    %v257 = vadd.f32 %v88, %v256
    %v258 = vpop.f32.mrf.mxu0
    %v259 = vpop.f32.mrf.mxu0
    %v260 = vadd.f32 %v88, %v259
    %v261 = vpop.f32.mrf.mxu0
    %262 = vdwg.mxu0
    %279 = vset.pattern.permute.xlu0 0
    %280 = vperm.xlu0 %279, %v201
    %v281 = vpop.permute.xlu0 %280
    %282 = vset.pattern.permute.xlu0 0
    %283 = vperm.xlu0 %282, %v204
    %v284 = vpop.permute.xlu0 %283
    %285 = vset.pattern.permute.xlu0 0
    %286 = vperm.xlu0 %285, %v209
    %v287 = vpop.permute.xlu0 %286
    %288 = vset.pattern.permute.xlu0 0
    %289 = vperm.xlu0 %288, %v212
    %v290 = vpop.permute.xlu0 %289
    %291 = vset.pattern.permute.xlu0 0
    %292 = vperm.xlu0 %291, %v217
    %v293 = vpop.permute.xlu0 %292
    %294 = vset.pattern.permute.xlu0 0
    %295 = vperm.xlu0 %294, %v220
    %v296 = vpop.permute.xlu0 %295
    %297 = vset.pattern.permute.xlu0 0
    %298 = vperm.xlu0 %297, %v225
    %v299 = vpop.permute.xlu0 %298
    %300 = vset.pattern.permute.xlu0 0
    %301 = vperm.xlu0 %300, %v228
    %v302 = vpop.permute.xlu0 %301
    %303 = vset.pattern.permute.xlu0 0
    %304 = vperm.xlu0 %303, %v233
    %v305 = vpop.permute.xlu0 %304
    %306 = vset.pattern.permute.xlu0 0
    %307 = vperm.xlu0 %306, %v236
    %v308 = vpop.permute.xlu0 %307
    %309 = vset.pattern.permute.xlu0 0
    %310 = vperm.xlu0 %309, %v241
    %v311 = vpop.permute.xlu0 %310
    %312 = vset.pattern.permute.xlu0 0
    %313 = vperm.xlu0 %312, %v244
    %v314 = vpop.permute.xlu0 %313
    %315 = vset.pattern.permute.xlu0 0
    %316 = vperm.xlu0 %315, %v249
    %v317 = vpop.permute.xlu0 %316
    %318 = vset.pattern.permute.xlu0 0
    %319 = vperm.xlu0 %318, %v252
    %v320 = vpop.permute.xlu0 %319
    %321 = vset.pattern.permute.xlu0 0
    %322 = vperm.xlu0 %321, %v257
    %v323 = vpop.permute.xlu0 %322
    %324 = vset.pattern.permute.xlu0 0
    %325 = vperm.xlu0 %324, %v260
    %v326 = vpop.permute.xlu0 %325
    %v327 = vlaneseq
    %v328 = vand.u32 %v327, 127
    %v329 = vlaneseq
    %v330 = vshrl.u32 %v329, 7
    %v331 = vsub.s32 %v328, %v330
    %v332 = vrot.slane %v281, %v331
    %v333 = vlaneseq
    %v334 = vshrl.u32 %v333, 7
    %v335 = vsub.s32 %v328, %v334
    %v336 = vrot.slane %v284, %v335
    %v337 = vlaneseq
    %v338 = vshrl.u32 %v337, 7
    %v339 = vsub.s32 %v328, %v338
    %v340 = vrot.slane %v287, %v339
    %v341 = vlaneseq
    %v342 = vshrl.u32 %v341, 7
    %v343 = vsub.s32 %v328, %v342
    %v344 = vrot.slane %v290, %v343
    %v345 = vlaneseq
    %v346 = vshrl.u32 %v345, 7
    %v347 = vsub.s32 %v328, %v346
    %v348 = vrot.slane %v293, %v347
    %v349 = vlaneseq
    %v350 = vshrl.u32 %v349, 7
    %v351 = vsub.s32 %v328, %v350
    %v352 = vrot.slane %v296, %v351
    %v353 = vlaneseq
    %v354 = vshrl.u32 %v353, 7
    %v355 = vsub.s32 %v328, %v354
    %v356 = vrot.slane %v299, %v355
    %v357 = vlaneseq
    %v358 = vshrl.u32 %v357, 7
    %v359 = vsub.s32 %v328, %v358
    %v360 = vrot.slane %v302, %v359
    %v361 = vlaneseq
    %v362 = vshrl.u32 %v361, 7
    %v363 = vsub.s32 %v328, %v362
    %v364 = vrot.slane %v305, %v363
    %v365 = vlaneseq
    %v366 = vshrl.u32 %v365, 7
    %v367 = vsub.s32 %v328, %v366
    %v368 = vrot.slane %v308, %v367
    %v369 = vlaneseq
    %v370 = vshrl.u32 %v369, 7
    %v371 = vsub.s32 %v328, %v370
    %v372 = vrot.slane %v311, %v371
    %v373 = vlaneseq
    %v374 = vshrl.u32 %v373, 7
    %v375 = vsub.s32 %v328, %v374
    %v376 = vrot.slane %v314, %v375
    %v377 = vlaneseq
    %v378 = vshrl.u32 %v377, 7
    %v379 = vsub.s32 %v328, %v378
    %v380 = vrot.slane %v317, %v379
    %v381 = vlaneseq
    %v382 = vshrl.u32 %v381, 7
    %v383 = vsub.s32 %v328, %v382
    %v384 = vrot.slane %v320, %v383
    %v385 = vlaneseq
    %v386 = vshrl.u32 %v385, 7
    %v387 = vsub.s32 %v328, %v386
    %v388 = vrot.slane %v323, %v387
    %v389 = vlaneseq
    %v390 = vshrl.u32 %v389, 7
    %v391 = vsub.s32 %v328, %v390
    %v392 = vrot.slane %v326, %v391
    %vm393 = vcmask 1041409
    %v394 = vsel %vm393, %v336, %v332
    %vm395 = vcmask 1042434
    %v396 = vsel %vm395, %v340, %v394
    %vm397 = vcmask 1043459
    %v398 = vsel %vm397, %v344, %v396
    %vm399 = vcmask 1044484
    %v400 = vsel %vm399, %v348, %v398
    %vm401 = vcmask 1045509
    %v402 = vsel %vm401, %v352, %v400
    %vm403 = vcmask 1046534
    %v404 = vsel %vm403, %v356, %v402
    %vm405 = vcmask 1047559
    %v406 = vsel %vm405, %v360, %v404
    %v407 = vsel %vm393, %v368, %v364
    %v408 = vsel %vm395, %v372, %v407
    %v409 = vsel %vm397, %v376, %v408
    %v410 = vsel %vm399, %v380, %v409
    %v411 = vsel %vm401, %v384, %v410
    %v412 = vsel %vm403, %v388, %v411
    %v413 = vsel %vm405, %v392, %v412
    %416 = vxpose.xlu0.b32.start [1/16] %v406, 128
    %417 = vxpose.xlu0.b32.cont [2/16] %v413, 128
    %418 = vxpose.xlu0.b32.cont [3/16] 0.0, 128
    %419 = vxpose.xlu0.b32.cont [4/16] 0.0, 128
    %420 = vxpose.xlu0.b32.cont [5/16] 0.0, 128
    %421 = vxpose.xlu0.b32.cont [6/16] 0.0, 128
    %422 = vxpose.xlu0.b32.cont [7/16] 0.0, 128
    %423 = vxpose.xlu0.b32.cont [8/16] 0.0, 128
    %424 = vxpose.xlu0.b32.cont [9/16] 0.0, 128
    %425 = vxpose.xlu0.b32.cont [10/16] 0.0, 128
    %426 = vxpose.xlu0.b32.cont [11/16] 0.0, 128
    %427 = vxpose.xlu0.b32.cont [12/16] 0.0, 128
    %428 = vxpose.xlu0.b32.cont [13/16] 0.0, 128
    %429 = vxpose.xlu0.b32.cont [14/16] 0.0, 128
    %430 = vxpose.xlu0.b32.cont [15/16] 0.0, 128
    %431 = vxpose.xlu0.b32.end [16/16] 0.0, 128
    %v432 = vpop.trf.xlu0
    %v433 = vpop.trf.xlu0
    %v434 = vpop.trf.xlu0
    %v435 = vpop.trf.xlu0
    %v436 = vpop.trf.xlu0
    %v437 = vpop.trf.xlu0
    %v438 = vpop.trf.xlu0
    %v439 = vpop.trf.xlu0
    %v440 = vpop.trf.xlu0
    %v441 = vpop.trf.xlu0
    %v442 = vpop.trf.xlu0
    %v443 = vpop.trf.xlu0
    %v444 = vpop.trf.xlu0
    %v445 = vpop.trf.xlu0
    %v446 = vpop.trf.xlu0
    %v447 = vpop.trf.xlu0
    %v448 = vld [vmem:[%s2] sm:$0xff]
    %449 = vset.pattern.permute.xlu0 0
    %450 = vperm.xlu0 %449, %v448
    %v451 = vpop.permute.xlu0 %450
    %vm452 = vcmp.lt.s32.totalorder %v328, %v451
    %v453 = vsel %vm452, %v432, -100000.0
    %vm454 = vcmask 130048
    %v455 = vsel %vm454, %v453, -inf
    %456 = vmax.xlane.f32.xlu0 %v455
    %v457 = vpop.xlane.xlu0 %456
    %v458 = vsub.f32 %v453, %v457
    %v459 = vmul.f32 %v458, 1.442695
    %v460 = vpow.pop %v459
    %v461 = vsel %vm454, %v460, 0.0
    %462 = vadd.xlane.f32.xlu0 %v461
    %v463 = vpop.xlane.xlu0 %462
    %v464 = vlog2.pop %v463
    %v465 = vmul.f32 %v464, 0.6931472
    %v466 = vadd.f32 %v465, %v457
    %v467 = vsub.f32 %v453, %v466
    %v468 = vld [vmem:[#allocation6] sm:$0xff]
    %v469 = vadd.f32 %v453, %v468
    %v470 = vsel %vm454, %v469, -inf
    %471 = vmax.xlane.f32.xlu0 %v470
    %v472 = vpop.xlane.xlu0 %471
    %vm473 = vcmp.eq.f32.partialorder %v469, %v472
    %v474 = vsel %vm473, %v328, 16
    %v475 = vsel %vm454, %v474, 2147483647
    %v476 = vand.u32 %v475, 65535
    %v477 = vshra.s32 %v475, 16
    %v478 = vcvt.s32.f32 %v476
    %v479 = vcvt.s32.f32 %v477
    %480 = vmin.xlane.f32.xlu0 %v479
    %v481 = vpop.xlane.xlu0 %480
    %vm482 = vcmp.eq.f32.partialorder %v479, %v481
    %v483 = vsel %vm482, %v478, inf
    %484 = vmin.xlane.f32.xlu0 %v483
    %v485 = vpop.xlane.xlu0 %484
    %v486 = vcvt.f32.s32 %v485
    %v487 = vcvt.f32.s32 %v481
    %v488 = vshll.u32 %v487, 16
    %v489 = vadd.s32 %v488, %v486
    %vm490 = vcmp.eq.s32.totalorder %v328, %v489
    %v491 = vsel %vm490, %v467, 0.0
    %v492 = vsel %vm454, %v491, 0.0
    %493 = vadd.xlane.f32.xlu0 %v492
    %v494 = vpop.xlane.xlu0 %493
    %vm495 = vcmp.eq.s32.totalorder %v489, 0
    %vm496 = vcmp.eq.s32.totalorder %v489, 1
    %vm497 = vcmp.eq.s32.totalorder %v489, 2
    %vm498 = vcmp.eq.s32.totalorder %v489, 3
    %vm499 = vcmp.eq.s32.totalorder %v489, 4
    %vm500 = vcmp.eq.s32.totalorder %v489, 5
    %vm501 = vcmp.eq.s32.totalorder %v489, 6
    %vm502 = vcmp.eq.s32.totalorder %v489, 7
    %vm503 = vcmp.eq.s32.totalorder %v489, 8
    %vm504 = vcmp.eq.s32.totalorder %v489, 9
    %vm505 = vcmp.eq.s32.totalorder %v489, 10
    %vm506 = vcmp.eq.s32.totalorder %v489, 11
    %vm507 = vcmp.eq.s32.totalorder %v489, 12
    %vm508 = vcmp.eq.s32.totalorder %v489, 13
    %vm509 = vcmp.eq.s32.totalorder %v489, 14
    %vm510 = vcmp.eq.s32.totalorder %v489, 15
    %v511 = vsel %vm495, 1, 0
    %v512 = vsel %vm496, 1, 0
    %v513 = vsel %vm497, 1, 0
    %v514 = vsel %vm498, 1, 0
    %v515 = vsel %vm499, 1, 0
    %v516 = vsel %vm500, 1, 0
    %v517 = vsel %vm501, 1, 0
    %v518 = vsel %vm502, 1, 0
    %v519 = vsel %vm503, 1, 0
    %v520 = vsel %vm504, 1, 0
    %v521 = vsel %vm505, 1, 0
    %v522 = vsel %vm506, 1, 0
    %v523 = vsel %vm507, 1, 0
    %v524 = vsel %vm508, 1, 0
    %v525 = vsel %vm509, 1, 0
    %v526 = vsel %vm510, 1, 0
    %vm527 = vcmp.eq.s32.totalorder %v511, 1
    %vm528 = vcmp.eq.s32.totalorder %v512, 1
    %vm529 = vcmp.eq.s32.totalorder %v513, 1
    %vm530 = vcmp.eq.s32.totalorder %v514, 1
    %vm531 = vcmp.eq.s32.totalorder %v515, 1
    %vm532 = vcmp.eq.s32.totalorder %v516, 1
    %vm533 = vcmp.eq.s32.totalorder %v517, 1
    %vm534 = vcmp.eq.s32.totalorder %v518, 1
    %vm535 = vcmp.eq.s32.totalorder %v519, 1
    %vm536 = vcmp.eq.s32.totalorder %v520, 1
    %vm537 = vcmp.eq.s32.totalorder %v521, 1
    %vm538 = vcmp.eq.s32.totalorder %v522, 1
    %vm539 = vcmp.eq.s32.totalorder %v523, 1
    %vm540 = vcmp.eq.s32.totalorder %v524, 1
    %vm541 = vcmp.eq.s32.totalorder %v525, 1
    %vm542 = vcmp.eq.s32.totalorder %v526, 1
    %v543 = vsel %vm527, %v201, 0.0
    %v544 = vsel %vm528, %v204, 0.0
    %v545 = vsel %vm529, %v209, 0.0
    %v546 = vsel %vm530, %v212, 0.0
    %v547 = vsel %vm531, %v217, 0.0
    %v548 = vsel %vm532, %v220, 0.0
    %v549 = vsel %vm533, %v225, 0.0
    %v550 = vsel %vm534, %v228, 0.0
    %v551 = vsel %vm535, %v233, 0.0
    %v552 = vsel %vm536, %v236, 0.0
    %v553 = vsel %vm537, %v241, 0.0
    %v554 = vsel %vm538, %v244, 0.0
    %v555 = vsel %vm539, %v249, 0.0
    %v556 = vsel %vm540, %v252, 0.0
    %v557 = vsel %vm541, %v257, 0.0
    %v558 = vsel %vm542, %v260, 0.0
    %vm559 = vcmask 171016
    %v560 = vsel %vm559, %v543, 0.0
    %v561 = vsel %vm559, %v544, 0.0
    %v562 = vadd.f32 %v560, %v561
    %v563 = vsel %vm559, %v545, 0.0
    %v564 = vadd.f32 %v562, %v563
    %v565 = vsel %vm559, %v546, 0.0
    %v566 = vadd.f32 %v564, %v565
    %v567 = vsel %vm559, %v547, 0.0
    %v568 = vadd.f32 %v566, %v567
    %v569 = vsel %vm559, %v548, 0.0
    %v570 = vadd.f32 %v568, %v569
    %v571 = vsel %vm559, %v549, 0.0
    %v572 = vadd.f32 %v570, %v571
    %v573 = vsel %vm559, %v550, 0.0
    %v574 = vadd.f32 %v572, %v573
    %v575 = vsel %vm559, %v551, 0.0
    %v576 = vadd.f32 %v574, %v575
    %v577 = vsel %vm559, %v552, 0.0
    %v578 = vadd.f32 %v576, %v577
    %v579 = vsel %vm559, %v553, 0.0
    %v580 = vadd.f32 %v578, %v579
    %v581 = vsel %vm559, %v554, 0.0
    %v582 = vadd.f32 %v580, %v581
    %v583 = vsel %vm559, %v555, 0.0
    %v584 = vadd.f32 %v582, %v583
    %v585 = vsel %vm559, %v556, 0.0
    %v586 = vadd.f32 %v584, %v585
    %v587 = vsel %vm559, %v557, 0.0
    %v588 = vadd.f32 %v586, %v587
    %v589 = vsel %vm559, %v558, 0.0
    %v590 = vadd.f32 %v588, %v589
    %v591 = vld [vmem:[#allocation4] sm:$0xff]
    %v592 = vsel %vm490, %v591, 0
    %v593 = vsel %vm454, %v592, 0
    %v594 = vand.u32 %v593, 65535
    %v595 = vshrl.u32 %v593, 16
    %v596 = vcvt.s32.f32 %v594
    %v597 = vcvt.s32.f32 %v595
    %598 = vadd.xlane.f32.xlu0 %v596
    %v599 = vpop.xlane.xlu0 %598
    %600 = vadd.xlane.f32.xlu0 %v597
    %v601 = vpop.xlane.xlu0 %600
    %v602 = vcvt.f32.s32 %v599
    %v603 = vcvt.f32.s32 %v601
    %v604 = vshll.u32 %v603, 16
    %v605 = vadd.s32 %v604, %v602
    %v606 = vsub.s32 %v605, 1
    %vm607 = vcmp.lt.s32.totalorder %v606, 0
    %v608 = vadd.s32 %v606, 20
    %v609 = vsel %vm607, %v608, %v606
    %vm610 = vcmp.eq.s32.totalorder %v328, %v609
    %612 = vrot.lane.b32.xlu0 %v590, 127
    %v613 = vpop.permute.xlu0 %612
    %v615 = vsel %vm610, -100000.0, %v613
    %vm616 = vcmask 162816
    %v617 = vsel %vm616, %v615, -inf
    %618 = vmax.xlane.f32.xlu0 %v617
    %v619 = vpop.xlane.xlu0 %618
    %v620 = vsub.f32 %v615, %v619
    %v621 = vmul.f32 %v620, 1.442695
    %v622 = vpow.pop %v621
    %v623 = vsel %vm616, %v622, 0.0
    %624 = vadd.xlane.f32.xlu0 %v623
    %v625 = vpop.xlane.xlu0 %624
    %v626 = vlog2.pop %v625
    %v627 = vmul.f32 %v626, 0.6931472
    %v628 = vadd.f32 %v627, %v619
    %v629 = vsub.f32 %v615, %v628
    %631 = vrot.lane.b32.xlu0 %v468, 112
    %v632 = vpop.permute.xlu0 %631
    %v634 = vadd.f32 %v615, %v632
    %v635 = vsel %vm616, %v634, -inf
    %636 = vmax.xlane.f32.xlu0 %v635
    %v637 = vpop.xlane.xlu0 %636
    %vm638 = vcmp.eq.f32.partialorder %v634, %v637
    %v639 = vsel %vm638, %v328, 20
    %v640 = vsel %vm616, %v639, 2147483647
    %v641 = vand.u32 %v640, 65535
    %v642 = vshra.s32 %v640, 16
    %v643 = vcvt.s32.f32 %v641
    %v644 = vcvt.s32.f32 %v642
    %645 = vmin.xlane.f32.xlu0 %v644
    %v646 = vpop.xlane.xlu0 %645
    %vm647 = vcmp.eq.f32.partialorder %v644, %v646
    %v648 = vsel %vm647, %v643, inf
    %649 = vmin.xlane.f32.xlu0 %v648
    %v650 = vpop.xlane.xlu0 %649
    %v651 = vcvt.f32.s32 %v650
    %v652 = vcvt.f32.s32 %v646
    %v653 = vshll.u32 %v652, 16
    %v654 = vadd.s32 %v653, %v651
    %vm655 = vcmp.eq.s32.totalorder %v328, %v654
    %v656 = vsel %vm655, %v629, 0.0
    %v657 = vsel %vm616, %v656, 0.0
    %658 = vadd.xlane.f32.xlu0 %v657
    %v659 = vpop.xlane.xlu0 %658
    %v660 = vadd.s32 %v654, 1
    %vm661 = vcmask 7168
    %v662 = vsel %vm661, %v489, %v660
    %vm663 = vcmask 15360
    %v664 = vsel %vm663, %v662, 0
    %665 = vst [vmem:[%s6] sm:$0xff] %v664
    %v666 = vadd.f32 %v494, %v659
    %668 = vrot.lane.b32.xlu0 %v615, 16
    %v669 = vpop.permute.xlu0 %668
    %v671 = vsel %vm454, %v453, %v669
    %vm672 = vcmask 293888
    %v673 = vsel %vm672, %v671, %v666
    %vm674 = vcmask 302080
    %v675 = vsel %vm674, %v673, 0.0
    %676 = vst [vmem:[%s7] sm:$0xff] %v675
    // Predicated region
    $region38: #{peptide_action_net_forward.1} parent=1 // pred_check
      _
    $region39: #{peptide_action_net_forward.1} parent=1 // pred_check_branch
      %678 = sbr.rel (0) target = $region41
    $region40: #{peptide_action_net_forward.1} parent=1 // pred_region
      _
    $region41: #{peptide_action_net_forward.1} parent=1 // pred_fallthru
      _
    // Predicated region
    $region42: #{peptide_action_net_forward.1} parent=1 // pred_check
      _
    $region43: #{peptide_action_net_forward.1} parent=1 // pred_check_branch
      %680 = sbr.rel (0) target = $region45
    $region44: #{peptide_action_net_forward.1} parent=1 // pred_region
      _
    $region45: #{peptide_action_net_forward.1} parent=1 // pred_fallthru
      _
    // Predicated region
    $region46: #{peptide_action_net_forward.1} parent=1 // pred_check
      _
    $region47: #{peptide_action_net_forward.1} parent=1 // pred_check_branch
      %682 = sbr.rel (0) target = $region49
    $region48: #{peptide_action_net_forward.1} parent=1 // pred_region
      _
    $region49: #{peptide_action_net_forward.1} parent=1 // pred_fallthru
      _
    // Predicated region
    $region50: #{peptide_action_net_forward.1} parent=1 // pred_check
      _
    $region51: #{peptide_action_net_forward.1} parent=1 // pred_check_branch
      %684 = sbr.rel (0) target = $region53
    $region52: #{peptide_action_net_forward.1} parent=1 // pred_region
      _
    $region53: #{peptide_action_net_forward.1} parent=1 // pred_fallthru
      _
    %685 = vsyncpa [#allocation3], 1
    %686 = vsyncpa [#allocation5], 1

</llo_original>
